<compile_context>
chip_gen: v6e
topology: v6e:2x2x1
jax: 0.10.0
libtpu: 0.0.40
codegen_flags: <defaults>
</compile_context>

<pallas_src>
import functools

import numpy as np
import jax
import jax.numpy as jnp
from jax import lax
from jax.experimental import pallas as pl
from jax.experimental.pallas import tpu as pltpu


def _round_up(a, b):
    return ((a + b - 1) // b) * b


def make_sobel_weight(out_channels, in_per_group, k):
    """Deterministic Sobel kernel bank, identical to the PyTorch __init__."""
    assert k % 2 == 1
    w = np.zeros((out_channels, in_per_group, k, k), dtype=np.float32)
    mid = k // 2
    for idx in range(out_channels):
        m = idx % 4
        if m == 0:
            w[idx, :, 0, :] = -1
            w[idx, :, 0, mid] = -2
            w[idx, :, -1, :] = 1
            w[idx, :, -1, mid] = 2
        elif m == 1:
            w[idx, :, :, 0] = -1
            w[idx, :, mid, 0] = -2
            w[idx, :, :, -1] = 1
            w[idx, :, mid, -1] = 2
        elif m == 2:
            w[idx, :, 0, 0] = -2
            for i in range(mid + 1):
                w[idx, :, mid - i, i] = -1
                w[idx, :, k - 1 - i, mid + i] = 1
            w[idx, :, -1, -1] = 2
        else:
            w[idx, :, -1, 0] = -2
            for i in range(mid + 1):
                w[idx, :, mid + i, i] = -1
                w[idx, :, i, mid + i] = 1
            w[idx, :, 0, -1] = 2
    return w


def _sobel_conv_kernel(x_ref, w_ref, b_ref, o_ref, *, C, KH, KW, Wp, dilation, Pp):
    """Direct conv for one image.

    x_ref: (C, Lp)   flattened, spatially padded image (zero-padded tail)
    w_ref: (OCp, K)  factor-scaled weights, K = C*KH*KW (OIHW flattening)
    b_ref: (OCp, 1)  bias column
    o_ref: (OCp, Pp) stride-1 flat output: OC on sublanes, flattened
                     (out_row, padded_col) on lanes.
    """
    w = w_ref[...]                                        # (OCp, K)
    x = x_ref[...]                                        # (C, Lp), one load
    acc = jnp.broadcast_to(b_ref[...], o_ref.shape)       # bias-initialized acc
    for kh in range(KH):
        for kw in range(KW):
            off = (kh * Wp + kw) * dilation
            slab = x[:, off:off + Pp]                     # (C, Pp) shifted slab
            for c in range(C):
                tap = c * KH * KW + kh * KW + kw
                # (OCp,1) * (1,Pp) broadcast FMA on the VPU.
                acc = acc + w[:, tap:tap + 1] * slab[c:c + 1, :]
    o_ref[...] = acc


def sobel_conv2d(x, sobel_weight, sobel_factor, bias,
                 stride=1, padding=0, dilation=1, groups=1):
    """x: (N, C, H, W) float32. Returns (N, OC, OH, OW) float32."""
    assert groups == 1  # TODO(synk): grouped convolution not implemented
    N, C, H, W = x.shape
    OC, Cg, KH, KW = sobel_weight.shape
    assert Cg == C

    Hp = H + 2 * padding
    Wp = W + 2 * padding
    OH_s1 = Hp - dilation * (KH - 1)      # stride-1 output rows
    OW_s1 = Wp - dilation * (KW - 1)      # stride-1 output cols (valid)
    assert OH_s1 > 0 and OW_s1 > 0
    OH = (H + 2 * padding - dilation * (KH - 1) - 1) // stride + 1
    OW = (W + 2 * padding - dilation * (KW - 1) - 1) // stride + 1

    K = C * KH * KW
    OCp = _round_up(OC, 8)                          # f32 sublane tile
    P = OH_s1 * Wp                                  # flat stride-1 output len
    Pp = _round_up(P, 128)                          # lane-dense output width
    off_max = (KH - 1) * dilation * Wp + (KW - 1) * dilation
    Lp = _round_up(Pp + off_max, 128)               # input slab length

    # Spatial pad, flatten, zero-pad tail so every shifted slice is in-bounds.
    xp = jnp.pad(x.astype(jnp.float32),
                 ((0, 0), (0, 0), (padding, padding), (padding, padding)))
    xflat = xp.reshape(N, C, Hp * Wp)
    xflat = jnp.pad(xflat, ((0, 0), (0, 0), (0, Lp - Hp * Wp)))

    # Fold the per-out-channel factor into the weight (tiny, wrapper-side).
    w = (sobel_weight.astype(jnp.float32) *
         sobel_factor.astype(jnp.float32).reshape(OC, 1, 1, 1)).reshape(OC, K)
    w_pad = jnp.zeros((OCp, K), jnp.float32).at[:OC, :].set(w)
    if bias is None:
        b = jnp.zeros((OC,), jnp.float32)
    else:
        b = bias.astype(jnp.float32).reshape(OC)
    b_pad = jnp.zeros((OCp, 1), jnp.float32).at[:OC, 0].set(b)

    kernel = functools.partial(_sobel_conv_kernel, C=C, KH=KH, KW=KW,
                               Wp=Wp, dilation=dilation, Pp=Pp)

    out_flat = pl.pallas_call(
        kernel,
        out_shape=jax.ShapeDtypeStruct((N, OCp, Pp), jnp.float32),
        grid_spec=pltpu.PrefetchScalarGridSpec(
            num_scalar_prefetch=0,
            grid=(N,),
            in_specs=[
                pl.BlockSpec((None, C, Lp), lambda n: (n, 0, 0)),   # image slab
                pl.BlockSpec((OCp, K), lambda n: (0, 0)),           # weights
                pl.BlockSpec((OCp, 1), lambda n: (0, 0)),           # bias
            ],
            out_specs=pl.BlockSpec((None, OCp, Pp), lambda n: (n, 0, 0)),
        ),
        compiler_params=pltpu.CompilerParams(
            dimension_semantics=("parallel",)),
    )(xflat, w_pad, b_pad)

    # Drop padded channels / flat tail, un-flatten, drop wrap columns, stride.
    out = out_flat[:, :OC, :P].reshape(N, OC, OH_s1, Wp)
    out = out[:, :, ::stride, 0:OW_s1:stride]
    assert out.shape == (N, OC, OH, OW)
    return out


def _reference(x, sobel_weight, sobel_factor, bias, stride, padding, dilation):
    w_scaled = sobel_weight * sobel_factor
    ref = lax.conv_general_dilated(
        x, w_scaled, window_strides=(stride, stride),
        padding=((padding, padding), (padding, padding)),
        rhs_dilation=(dilation, dilation),
        dimension_numbers=("NCHW", "OIHW", "NCHW"))
    return ref + bias[None, :, None, None]


if __name__ == "__main__":
    # Module config: in_channels=4, out_channels=8 (multiple of 4), k=3,
    # groups=1, bias=True.
    in_channels, out_channels, ksize = 4, 8, 3
    N, H, W = 2, 16, 16

    key = jax.random.PRNGKey(0)
    kx, kb, kf = jax.random.split(key, 3)
    x = jax.random.normal(kx, (N, in_channels, H, W), dtype=jnp.float32)

    sobel_weight = jnp.asarray(
        make_sobel_weight(out_channels, in_channels, ksize))
    bias = 0.1 * jax.random.normal(kb, (out_channels,), dtype=jnp.float32)
    sobel_factor = (1.0 + 0.1 * jax.random.normal(
        kf, (out_channels, 1, 1, 1), dtype=jnp.float32))

    # Config 1: module defaults (stride=1, padding=0, dilation=1).
    out1 = sobel_conv2d(x, sobel_weight, sobel_factor, bias,
                        stride=1, padding=0, dilation=1)
    out1 = jax.block_until_ready(out1)
    ref1 = _reference(x, sobel_weight, sobel_factor, bias, 1, 0, 1)
    assert out1.shape == (N, out_channels, H - ksize + 1, W - ksize + 1)
    assert jnp.allclose(out1, ref1, atol=1e-4, rtol=1e-4), (
        float(jnp.max(jnp.abs(out1 - ref1))))

    # Config 2: exercise the stride / padding handling in the wrapper.
    out2 = sobel_conv2d(x, sobel_weight, sobel_factor, bias,
                        stride=2, padding=1, dilation=1)
    out2 = jax.block_until_ready(out2)
    ref2 = _reference(x, sobel_weight, sobel_factor, bias, 2, 1, 1)
    assert out2.shape == ref2.shape
    assert jnp.allclose(out2, ref2, atol=1e-4, rtol=1e-4), (
        float(jnp.max(jnp.abs(out2 - ref2))))

    print("KERNEL_OK")
</pallas_src>

<mosaic_0001>
module attributes {stable_mosaic.version = 11 : i64} {
  func.func @_sobel_conv_kernel(%arg0: i32, %arg1: memref<1x4x384xf32, #tpu.memory_space<vmem>>, %arg2: memref<8x36xf32, #tpu.memory_space<vmem>>, %arg3: memref<8x1xf32, #tpu.memory_space<vmem>>, %arg4: memref<1x8x256xf32, #tpu.memory_space<vmem>>) attributes {dimension_semantics = [#tpu.dimension_semantics<parallel>], iteration_bounds = array<i64: 2>, scalar_prefetch = 0 : i64, scratch_operands = 0 : i64, tpu.core_type = #tpu.core_type<tc>, window_params = [{transform_indices = @transform_0, window_bounds = array<i64: 1, 4, 384>}, {pipeline_mode = #tpu.pipeline_mode<synchronous>, transform_indices = @transform_1, window_bounds = array<i64: 8, 36>}, {pipeline_mode = #tpu.pipeline_mode<synchronous>, transform_indices = @transform_2, window_bounds = array<i64: 8, 1>}, {transform_indices = @transform_3, window_bounds = array<i64: 1, 8, 256>}]} {
    %c0 = arith.constant 0 : index
    %c0_0 = arith.constant 0 : index
    %0 = vector.load %arg2[%c0, %c0_0] : memref<8x36xf32, #tpu.memory_space<vmem>>, vector<8x36xf32>
    %c0_1 = arith.constant 0 : index
    %c0_2 = arith.constant 0 : index
    %c0_3 = arith.constant 0 : index
    %1 = vector.load %arg1[%c0_1, %c0_2, %c0_3] : memref<1x4x384xf32, #tpu.memory_space<vmem>>, vector<1x4x384xf32>
    %2 = vector.shape_cast %1 : vector<1x4x384xf32> to vector<4x384xf32>
    %c0_4 = arith.constant 0 : index
    %c0_5 = arith.constant 0 : index
    %3 = vector.load %arg3[%c0_4, %c0_5] : memref<8x1xf32, #tpu.memory_space<vmem>>, vector<8x1xf32>
    %4 = vector.shape_cast %3 : vector<8x1xf32> to vector<8x1xf32>
    %5 = vector.broadcast %4 : vector<8x1xf32> to vector<8x256xf32>
    %6 = vector.extract_strided_slice %2 {offsets = [0, 0], sizes = [4, 256], strides = [1, 1]} : vector<4x384xf32> to vector<4x256xf32>
    %7 = vector.extract_strided_slice %0 {offsets = [0, 0], sizes = [8, 1], strides = [1, 1]} : vector<8x36xf32> to vector<8x1xf32>
    %8 = vector.extract_strided_slice %6 {offsets = [0, 0], sizes = [1, 256], strides = [1, 1]} : vector<4x256xf32> to vector<1x256xf32>
    %9 = vector.broadcast %7 : vector<8x1xf32> to vector<8x256xf32>
    %10 = vector.broadcast %8 : vector<1x256xf32> to vector<8x256xf32>
    %11 = arith.mulf %9, %10 : vector<8x256xf32>
    %12 = arith.addf %5, %11 : vector<8x256xf32>
    %13 = vector.extract_strided_slice %0 {offsets = [0, 9], sizes = [8, 1], strides = [1, 1]} : vector<8x36xf32> to vector<8x1xf32>
    %14 = vector.extract_strided_slice %6 {offsets = [1, 0], sizes = [1, 256], strides = [1, 1]} : vector<4x256xf32> to vector<1x256xf32>
    %15 = vector.broadcast %13 : vector<8x1xf32> to vector<8x256xf32>
    %16 = vector.broadcast %14 : vector<1x256xf32> to vector<8x256xf32>
    %17 = arith.mulf %15, %16 : vector<8x256xf32>
    %18 = arith.addf %12, %17 : vector<8x256xf32>
    %19 = vector.extract_strided_slice %0 {offsets = [0, 18], sizes = [8, 1], strides = [1, 1]} : vector<8x36xf32> to vector<8x1xf32>
    %20 = vector.extract_strided_slice %6 {offsets = [2, 0], sizes = [1, 256], strides = [1, 1]} : vector<4x256xf32> to vector<1x256xf32>
    %21 = vector.broadcast %19 : vector<8x1xf32> to vector<8x256xf32>
    %22 = vector.broadcast %20 : vector<1x256xf32> to vector<8x256xf32>
    %23 = arith.mulf %21, %22 : vector<8x256xf32>
    %24 = arith.addf %18, %23 : vector<8x256xf32>
    %25 = vector.extract_strided_slice %0 {offsets = [0, 27], sizes = [8, 1], strides = [1, 1]} : vector<8x36xf32> to vector<8x1xf32>
    %26 = vector.extract_strided_slice %6 {offsets = [3, 0], sizes = [1, 256], strides = [1, 1]} : vector<4x256xf32> to vector<1x256xf32>
    %27 = vector.broadcast %25 : vector<8x1xf32> to vector<8x256xf32>
    %28 = vector.broadcast %26 : vector<1x256xf32> to vector<8x256xf32>
    %29 = arith.mulf %27, %28 : vector<8x256xf32>
    %30 = arith.addf %24, %29 : vector<8x256xf32>
    %31 = vector.extract_strided_slice %2 {offsets = [0, 1], sizes = [4, 256], strides = [1, 1]} : vector<4x384xf32> to vector<4x256xf32>
    %32 = vector.extract_strided_slice %0 {offsets = [0, 1], sizes = [8, 1], strides = [1, 1]} : vector<8x36xf32> to vector<8x1xf32>
    %33 = vector.extract_strided_slice %31 {offsets = [0, 0], sizes = [1, 256], strides = [1, 1]} : vector<4x256xf32> to vector<1x256xf32>
    %34 = vector.broadcast %32 : vector<8x1xf32> to vector<8x256xf32>
    %35 = vector.broadcast %33 : vector<1x256xf32> to vector<8x256xf32>
    %36 = arith.mulf %34, %35 : vector<8x256xf32>
    %37 = arith.addf %30, %36 : vector<8x256xf32>
    %38 = vector.extract_strided_slice %0 {offsets = [0, 10], sizes = [8, 1], strides = [1, 1]} : vector<8x36xf32> to vector<8x1xf32>
    %39 = vector.extract_strided_slice %31 {offsets = [1, 0], sizes = [1, 256], strides = [1, 1]} : vector<4x256xf32> to vector<1x256xf32>
    %40 = vector.broadcast %38 : vector<8x1xf32> to vector<8x256xf32>
    %41 = vector.broadcast %39 : vector<1x256xf32> to vector<8x256xf32>
    %42 = arith.mulf %40, %41 : vector<8x256xf32>
    %43 = arith.addf %37, %42 : vector<8x256xf32>
    %44 = vector.extract_strided_slice %0 {offsets = [0, 19], sizes = [8, 1], strides = [1, 1]} : vector<8x36xf32> to vector<8x1xf32>
    %45 = vector.extract_strided_slice %31 {offsets = [2, 0], sizes = [1, 256], strides = [1, 1]} : vector<4x256xf32> to vector<1x256xf32>
    %46 = vector.broadcast %44 : vector<8x1xf32> to vector<8x256xf32>
    %47 = vector.broadcast %45 : vector<1x256xf32> to vector<8x256xf32>
    %48 = arith.mulf %46, %47 : vector<8x256xf32>
    %49 = arith.addf %43, %48 : vector<8x256xf32>
    %50 = vector.extract_strided_slice %0 {offsets = [0, 28], sizes = [8, 1], strides = [1, 1]} : vector<8x36xf32> to vector<8x1xf32>
    %51 = vector.extract_strided_slice %31 {offsets = [3, 0], sizes = [1, 256], strides = [1, 1]} : vector<4x256xf32> to vector<1x256xf32>
    %52 = vector.broadcast %50 : vector<8x1xf32> to vector<8x256xf32>
    %53 = vector.broadcast %51 : vector<1x256xf32> to vector<8x256xf32>
    %54 = arith.mulf %52, %53 : vector<8x256xf32>
    %55 = arith.addf %49, %54 : vector<8x256xf32>
    %56 = vector.extract_strided_slice %2 {offsets = [0, 2], sizes = [4, 256], strides = [1, 1]} : vector<4x384xf32> to vector<4x256xf32>
    %57 = vector.extract_strided_slice %0 {offsets = [0, 2], sizes = [8, 1], strides = [1, 1]} : vector<8x36xf32> to vector<8x1xf32>
    %58 = vector.extract_strided_slice %56 {offsets = [0, 0], sizes = [1, 256], strides = [1, 1]} : vector<4x256xf32> to vector<1x256xf32>
    %59 = vector.broadcast %57 : vector<8x1xf32> to vector<8x256xf32>
    %60 = vector.broadcast %58 : vector<1x256xf32> to vector<8x256xf32>
    %61 = arith.mulf %59, %60 : vector<8x256xf32>
    %62 = arith.addf %55, %61 : vector<8x256xf32>
    %63 = vector.extract_strided_slice %0 {offsets = [0, 11], sizes = [8, 1], strides = [1, 1]} : vector<8x36xf32> to vector<8x1xf32>
    %64 = vector.extract_strided_slice %56 {offsets = [1, 0], sizes = [1, 256], strides = [1, 1]} : vector<4x256xf32> to vector<1x256xf32>
    %65 = vector.broadcast %63 : vector<8x1xf32> to vector<8x256xf32>
    %66 = vector.broadcast %64 : vector<1x256xf32> to vector<8x256xf32>
    %67 = arith.mulf %65, %66 : vector<8x256xf32>
    %68 = arith.addf %62, %67 : vector<8x256xf32>
    %69 = vector.extract_strided_slice %0 {offsets = [0, 20], sizes = [8, 1], strides = [1, 1]} : vector<8x36xf32> to vector<8x1xf32>
    %70 = vector.extract_strided_slice %56 {offsets = [2, 0], sizes = [1, 256], strides = [1, 1]} : vector<4x256xf32> to vector<1x256xf32>
    %71 = vector.broadcast %69 : vector<8x1xf32> to vector<8x256xf32>
    %72 = vector.broadcast %70 : vector<1x256xf32> to vector<8x256xf32>
    %73 = arith.mulf %71, %72 : vector<8x256xf32>
    %74 = arith.addf %68, %73 : vector<8x256xf32>
    %75 = vector.extract_strided_slice %0 {offsets = [0, 29], sizes = [8, 1], strides = [1, 1]} : vector<8x36xf32> to vector<8x1xf32>
    %76 = vector.extract_strided_slice %56 {offsets = [3, 0], sizes = [1, 256], strides = [1, 1]} : vector<4x256xf32> to vector<1x256xf32>
    %77 = vector.broadcast %75 : vector<8x1xf32> to vector<8x256xf32>
    %78 = vector.broadcast %76 : vector<1x256xf32> to vector<8x256xf32>
    %79 = arith.mulf %77, %78 : vector<8x256xf32>
    %80 = arith.addf %74, %79 : vector<8x256xf32>
    %81 = vector.extract_strided_slice %2 {offsets = [0, 16], sizes = [4, 256], strides = [1, 1]} : vector<4x384xf32> to vector<4x256xf32>
    %82 = vector.extract_strided_slice %0 {offsets = [0, 3], sizes = [8, 1], strides = [1, 1]} : vector<8x36xf32> to vector<8x1xf32>
    %83 = vector.extract_strided_slice %81 {offsets = [0, 0], sizes = [1, 256], strides = [1, 1]} : vector<4x256xf32> to vector<1x256xf32>
    %84 = vector.broadcast %82 : vector<8x1xf32> to vector<8x256xf32>
    %85 = vector.broadcast %83 : vector<1x256xf32> to vector<8x256xf32>
    %86 = arith.mulf %84, %85 : vector<8x256xf32>
    %87 = arith.addf %80, %86 : vector<8x256xf32>
    %88 = vector.extract_strided_slice %0 {offsets = [0, 12], sizes = [8, 1], strides = [1, 1]} : vector<8x36xf32> to vector<8x1xf32>
    %89 = vector.extract_strided_slice %81 {offsets = [1, 0], sizes = [1, 256], strides = [1, 1]} : vector<4x256xf32> to vector<1x256xf32>
    %90 = vector.broadcast %88 : vector<8x1xf32> to vector<8x256xf32>
    %91 = vector.broadcast %89 : vector<1x256xf32> to vector<8x256xf32>
    %92 = arith.mulf %90, %91 : vector<8x256xf32>
    %93 = arith.addf %87, %92 : vector<8x256xf32>
    %94 = vector.extract_strided_slice %0 {offsets = [0, 21], sizes = [8, 1], strides = [1, 1]} : vector<8x36xf32> to vector<8x1xf32>
    %95 = vector.extract_strided_slice %81 {offsets = [2, 0], sizes = [1, 256], strides = [1, 1]} : vector<4x256xf32> to vector<1x256xf32>
    %96 = vector.broadcast %94 : vector<8x1xf32> to vector<8x256xf32>
    %97 = vector.broadcast %95 : vector<1x256xf32> to vector<8x256xf32>
    %98 = arith.mulf %96, %97 : vector<8x256xf32>
    %99 = arith.addf %93, %98 : vector<8x256xf32>
    %100 = vector.extract_strided_slice %0 {offsets = [0, 30], sizes = [8, 1], strides = [1, 1]} : vector<8x36xf32> to vector<8x1xf32>
    %101 = vector.extract_strided_slice %81 {offsets = [3, 0], sizes = [1, 256], strides = [1, 1]} : vector<4x256xf32> to vector<1x256xf32>
    %102 = vector.broadcast %100 : vector<8x1xf32> to vector<8x256xf32>
    %103 = vector.broadcast %101 : vector<1x256xf32> to vector<8x256xf32>
    %104 = arith.mulf %102, %103 : vector<8x256xf32>
    %105 = arith.addf %99, %104 : vector<8x256xf32>
    %106 = vector.extract_strided_slice %2 {offsets = [0, 17], sizes = [4, 256], strides = [1, 1]} : vector<4x384xf32> to vector<4x256xf32>
    %107 = vector.extract_strided_slice %0 {offsets = [0, 4], sizes = [8, 1], strides = [1, 1]} : vector<8x36xf32> to vector<8x1xf32>
    %108 = vector.extract_strided_slice %106 {offsets = [0, 0], sizes = [1, 256], strides = [1, 1]} : vector<4x256xf32> to vector<1x256xf32>
    %109 = vector.broadcast %107 : vector<8x1xf32> to vector<8x256xf32>
    %110 = vector.broadcast %108 : vector<1x256xf32> to vector<8x256xf32>
    %111 = arith.mulf %109, %110 : vector<8x256xf32>
    %112 = arith.addf %105, %111 : vector<8x256xf32>
    %113 = vector.extract_strided_slice %0 {offsets = [0, 13], sizes = [8, 1], strides = [1, 1]} : vector<8x36xf32> to vector<8x1xf32>
    %114 = vector.extract_strided_slice %106 {offsets = [1, 0], sizes = [1, 256], strides = [1, 1]} : vector<4x256xf32> to vector<1x256xf32>
    %115 = vector.broadcast %113 : vector<8x1xf32> to vector<8x256xf32>
    %116 = vector.broadcast %114 : vector<1x256xf32> to vector<8x256xf32>
    %117 = arith.mulf %115, %116 : vector<8x256xf32>
    %118 = arith.addf %112, %117 : vector<8x256xf32>
    %119 = vector.extract_strided_slice %0 {offsets = [0, 22], sizes = [8, 1], strides = [1, 1]} : vector<8x36xf32> to vector<8x1xf32>
    %120 = vector.extract_strided_slice %106 {offsets = [2, 0], sizes = [1, 256], strides = [1, 1]} : vector<4x256xf32> to vector<1x256xf32>
    %121 = vector.broadcast %119 : vector<8x1xf32> to vector<8x256xf32>
    %122 = vector.broadcast %120 : vector<1x256xf32> to vector<8x256xf32>
    %123 = arith.mulf %121, %122 : vector<8x256xf32>
    %124 = arith.addf %118, %123 : vector<8x256xf32>
    %125 = vector.extract_strided_slice %0 {offsets = [0, 31], sizes = [8, 1], strides = [1, 1]} : vector<8x36xf32> to vector<8x1xf32>
    %126 = vector.extract_strided_slice %106 {offsets = [3, 0], sizes = [1, 256], strides = [1, 1]} : vector<4x256xf32> to vector<1x256xf32>
    %127 = vector.broadcast %125 : vector<8x1xf32> to vector<8x256xf32>
    %128 = vector.broadcast %126 : vector<1x256xf32> to vector<8x256xf32>
    %129 = arith.mulf %127, %128 : vector<8x256xf32>
    %130 = arith.addf %124, %129 : vector<8x256xf32>
    %131 = vector.extract_strided_slice %2 {offsets = [0, 18], sizes = [4, 256], strides = [1, 1]} : vector<4x384xf32> to vector<4x256xf32>
    %132 = vector.extract_strided_slice %0 {offsets = [0, 5], sizes = [8, 1], strides = [1, 1]} : vector<8x36xf32> to vector<8x1xf32>
    %133 = vector.extract_strided_slice %131 {offsets = [0, 0], sizes = [1, 256], strides = [1, 1]} : vector<4x256xf32> to vector<1x256xf32>
    %134 = vector.broadcast %132 : vector<8x1xf32> to vector<8x256xf32>
    %135 = vector.broadcast %133 : vector<1x256xf32> to vector<8x256xf32>
    %136 = arith.mulf %134, %135 : vector<8x256xf32>
    %137 = arith.addf %130, %136 : vector<8x256xf32>
    %138 = vector.extract_strided_slice %0 {offsets = [0, 14], sizes = [8, 1], strides = [1, 1]} : vector<8x36xf32> to vector<8x1xf32>
    %139 = vector.extract_strided_slice %131 {offsets = [1, 0], sizes = [1, 256], strides = [1, 1]} : vector<4x256xf32> to vector<1x256xf32>
    %140 = vector.broadcast %138 : vector<8x1xf32> to vector<8x256xf32>
    %141 = vector.broadcast %139 : vector<1x256xf32> to vector<8x256xf32>
    %142 = arith.mulf %140, %141 : vector<8x256xf32>
    %143 = arith.addf %137, %142 : vector<8x256xf32>
    %144 = vector.extract_strided_slice %0 {offsets = [0, 23], sizes = [8, 1], strides = [1, 1]} : vector<8x36xf32> to vector<8x1xf32>
    %145 = vector.extract_strided_slice %131 {offsets = [2, 0], sizes = [1, 256], strides = [1, 1]} : vector<4x256xf32> to vector<1x256xf32>
    %146 = vector.broadcast %144 : vector<8x1xf32> to vector<8x256xf32>
    %147 = vector.broadcast %145 : vector<1x256xf32> to vector<8x256xf32>
    %148 = arith.mulf %146, %147 : vector<8x256xf32>
    %149 = arith.addf %143, %148 : vector<8x256xf32>
    %150 = vector.extract_strided_slice %0 {offsets = [0, 32], sizes = [8, 1], strides = [1, 1]} : vector<8x36xf32> to vector<8x1xf32>
    %151 = vector.extract_strided_slice %131 {offsets = [3, 0], sizes = [1, 256], strides = [1, 1]} : vector<4x256xf32> to vector<1x256xf32>
    %152 = vector.broadcast %150 : vector<8x1xf32> to vector<8x256xf32>
    %153 = vector.broadcast %151 : vector<1x256xf32> to vector<8x256xf32>
    %154 = arith.mulf %152, %153 : vector<8x256xf32>
    %155 = arith.addf %149, %154 : vector<8x256xf32>
    %156 = vector.extract_strided_slice %2 {offsets = [0, 32], sizes = [4, 256], strides = [1, 1]} : vector<4x384xf32> to vector<4x256xf32>
    %157 = vector.extract_strided_slice %0 {offsets = [0, 6], sizes = [8, 1], strides = [1, 1]} : vector<8x36xf32> to vector<8x1xf32>
    %158 = vector.extract_strided_slice %156 {offsets = [0, 0], sizes = [1, 256], strides = [1, 1]} : vector<4x256xf32> to vector<1x256xf32>
    %159 = vector.broadcast %157 : vector<8x1xf32> to vector<8x256xf32>
    %160 = vector.broadcast %158 : vector<1x256xf32> to vector<8x256xf32>
    %161 = arith.mulf %159, %160 : vector<8x256xf32>
    %162 = arith.addf %155, %161 : vector<8x256xf32>
    %163 = vector.extract_strided_slice %0 {offsets = [0, 15], sizes = [8, 1], strides = [1, 1]} : vector<8x36xf32> to vector<8x1xf32>
    %164 = vector.extract_strided_slice %156 {offsets = [1, 0], sizes = [1, 256], strides = [1, 1]} : vector<4x256xf32> to vector<1x256xf32>
    %165 = vector.broadcast %163 : vector<8x1xf32> to vector<8x256xf32>
    %166 = vector.broadcast %164 : vector<1x256xf32> to vector<8x256xf32>
    %167 = arith.mulf %165, %166 : vector<8x256xf32>
    %168 = arith.addf %162, %167 : vector<8x256xf32>
    %169 = vector.extract_strided_slice %0 {offsets = [0, 24], sizes = [8, 1], strides = [1, 1]} : vector<8x36xf32> to vector<8x1xf32>
    %170 = vector.extract_strided_slice %156 {offsets = [2, 0], sizes = [1, 256], strides = [1, 1]} : vector<4x256xf32> to vector<1x256xf32>
    %171 = vector.broadcast %169 : vector<8x1xf32> to vector<8x256xf32>
    %172 = vector.broadcast %170 : vector<1x256xf32> to vector<8x256xf32>
    %173 = arith.mulf %171, %172 : vector<8x256xf32>
    %174 = arith.addf %168, %173 : vector<8x256xf32>
    %175 = vector.extract_strided_slice %0 {offsets = [0, 33], sizes = [8, 1], strides = [1, 1]} : vector<8x36xf32> to vector<8x1xf32>
    %176 = vector.extract_strided_slice %156 {offsets = [3, 0], sizes = [1, 256], strides = [1, 1]} : vector<4x256xf32> to vector<1x256xf32>
    %177 = vector.broadcast %175 : vector<8x1xf32> to vector<8x256xf32>
    %178 = vector.broadcast %176 : vector<1x256xf32> to vector<8x256xf32>
    %179 = arith.mulf %177, %178 : vector<8x256xf32>
    %180 = arith.addf %174, %179 : vector<8x256xf32>
    %181 = vector.extract_strided_slice %2 {offsets = [0, 33], sizes = [4, 256], strides = [1, 1]} : vector<4x384xf32> to vector<4x256xf32>
    %182 = vector.extract_strided_slice %0 {offsets = [0, 7], sizes = [8, 1], strides = [1, 1]} : vector<8x36xf32> to vector<8x1xf32>
    %183 = vector.extract_strided_slice %181 {offsets = [0, 0], sizes = [1, 256], strides = [1, 1]} : vector<4x256xf32> to vector<1x256xf32>
    %184 = vector.broadcast %182 : vector<8x1xf32> to vector<8x256xf32>
    %185 = vector.broadcast %183 : vector<1x256xf32> to vector<8x256xf32>
    %186 = arith.mulf %184, %185 : vector<8x256xf32>
    %187 = arith.addf %180, %186 : vector<8x256xf32>
    %188 = vector.extract_strided_slice %0 {offsets = [0, 16], sizes = [8, 1], strides = [1, 1]} : vector<8x36xf32> to vector<8x1xf32>
    %189 = vector.extract_strided_slice %181 {offsets = [1, 0], sizes = [1, 256], strides = [1, 1]} : vector<4x256xf32> to vector<1x256xf32>
    %190 = vector.broadcast %188 : vector<8x1xf32> to vector<8x256xf32>
    %191 = vector.broadcast %189 : vector<1x256xf32> to vector<8x256xf32>
    %192 = arith.mulf %190, %191 : vector<8x256xf32>
    %193 = arith.addf %187, %192 : vector<8x256xf32>
    %194 = vector.extract_strided_slice %0 {offsets = [0, 25], sizes = [8, 1], strides = [1, 1]} : vector<8x36xf32> to vector<8x1xf32>
    %195 = vector.extract_strided_slice %181 {offsets = [2, 0], sizes = [1, 256], strides = [1, 1]} : vector<4x256xf32> to vector<1x256xf32>
    %196 = vector.broadcast %194 : vector<8x1xf32> to vector<8x256xf32>
    %197 = vector.broadcast %195 : vector<1x256xf32> to vector<8x256xf32>
    %198 = arith.mulf %196, %197 : vector<8x256xf32>
    %199 = arith.addf %193, %198 : vector<8x256xf32>
    %200 = vector.extract_strided_slice %0 {offsets = [0, 34], sizes = [8, 1], strides = [1, 1]} : vector<8x36xf32> to vector<8x1xf32>
    %201 = vector.extract_strided_slice %181 {offsets = [3, 0], sizes = [1, 256], strides = [1, 1]} : vector<4x256xf32> to vector<1x256xf32>
    %202 = vector.broadcast %200 : vector<8x1xf32> to vector<8x256xf32>
    %203 = vector.broadcast %201 : vector<1x256xf32> to vector<8x256xf32>
    %204 = arith.mulf %202, %203 : vector<8x256xf32>
    %205 = arith.addf %199, %204 : vector<8x256xf32>
    %206 = vector.extract_strided_slice %2 {offsets = [0, 34], sizes = [4, 256], strides = [1, 1]} : vector<4x384xf32> to vector<4x256xf32>
    %207 = vector.extract_strided_slice %0 {offsets = [0, 8], sizes = [8, 1], strides = [1, 1]} : vector<8x36xf32> to vector<8x1xf32>
    %208 = vector.extract_strided_slice %206 {offsets = [0, 0], sizes = [1, 256], strides = [1, 1]} : vector<4x256xf32> to vector<1x256xf32>
    %209 = vector.broadcast %207 : vector<8x1xf32> to vector<8x256xf32>
    %210 = vector.broadcast %208 : vector<1x256xf32> to vector<8x256xf32>
    %211 = arith.mulf %209, %210 : vector<8x256xf32>
    %212 = arith.addf %205, %211 : vector<8x256xf32>
    %213 = vector.extract_strided_slice %0 {offsets = [0, 17], sizes = [8, 1], strides = [1, 1]} : vector<8x36xf32> to vector<8x1xf32>
    %214 = vector.extract_strided_slice %206 {offsets = [1, 0], sizes = [1, 256], strides = [1, 1]} : vector<4x256xf32> to vector<1x256xf32>
    %215 = vector.broadcast %213 : vector<8x1xf32> to vector<8x256xf32>
    %216 = vector.broadcast %214 : vector<1x256xf32> to vector<8x256xf32>
    %217 = arith.mulf %215, %216 : vector<8x256xf32>
    %218 = arith.addf %212, %217 : vector<8x256xf32>
    %219 = vector.extract_strided_slice %0 {offsets = [0, 26], sizes = [8, 1], strides = [1, 1]} : vector<8x36xf32> to vector<8x1xf32>
    %220 = vector.extract_strided_slice %206 {offsets = [2, 0], sizes = [1, 256], strides = [1, 1]} : vector<4x256xf32> to vector<1x256xf32>
    %221 = vector.broadcast %219 : vector<8x1xf32> to vector<8x256xf32>
    %222 = vector.broadcast %220 : vector<1x256xf32> to vector<8x256xf32>
    %223 = arith.mulf %221, %222 : vector<8x256xf32>
    %224 = arith.addf %218, %223 : vector<8x256xf32>
    %225 = vector.extract_strided_slice %0 {offsets = [0, 35], sizes = [8, 1], strides = [1, 1]} : vector<8x36xf32> to vector<8x1xf32>
    %226 = vector.extract_strided_slice %206 {offsets = [3, 0], sizes = [1, 256], strides = [1, 1]} : vector<4x256xf32> to vector<1x256xf32>
    %227 = vector.broadcast %225 : vector<8x1xf32> to vector<8x256xf32>
    %228 = vector.broadcast %226 : vector<1x256xf32> to vector<8x256xf32>
    %229 = arith.mulf %227, %228 : vector<8x256xf32>
    %230 = arith.addf %224, %229 : vector<8x256xf32>
    %c0_6 = arith.constant 0 : index
    %c0_7 = arith.constant 0 : index
    %c0_8 = arith.constant 0 : index
    %231 = vector.load %arg4[%c0_6, %c0_7, %c0_8] : memref<1x8x256xf32, #tpu.memory_space<vmem>>, vector<1x8x256xf32>
    %232 = vector.shape_cast %231 : vector<1x8x256xf32> to vector<8x256xf32>
    %233 = vector.shape_cast %230 : vector<8x256xf32> to vector<1x8x256xf32>
    tpu.vector_store %arg4[%c0_6, %c0_7, %c0_8], %233 {strides = array<i32>} : memref<1x8x256xf32, #tpu.memory_space<vmem>>, vector<1x8x256xf32>,
    return
  }
  func.func @transform_0(%arg0: i32) -> (i32, i32, i32) {
    %c0_i32 = arith.constant 0 : i32
    %c0_i32_0 = arith.constant 0 : i32
    %c0_i32_1 = arith.constant 0 : i32
    return %arg0, %c0_i32, %c0_i32_0 : i32, i32, i32
  }
  func.func @transform_1(%arg0: i32) -> (i32, i32) {
    %c0_i32 = arith.constant 0 : i32
    %c0_i32_0 = arith.constant 0 : i32
    %c0_i32_1 = arith.constant 0 : i32
    return %c0_i32, %c0_i32_0 : i32, i32
  }
  func.func @transform_2(%arg0: i32) -> (i32, i32) {
    %c0_i32 = arith.constant 0 : i32
    %c0_i32_0 = arith.constant 0 : i32
    %c0_i32_1 = arith.constant 0 : i32
    return %c0_i32, %c0_i32_0 : i32, i32
  }
  func.func @transform_3(%arg0: i32) -> (i32, i32, i32) {
    %c0_i32 = arith.constant 0 : i32
    %c0_i32_0 = arith.constant 0 : i32
    %c0_i32_1 = arith.constant 0 : i32
    return %arg0, %c0_i32, %c0_i32_0 : i32, i32, i32
  }
}

</mosaic_0001>

<llo_original>
// kernel: tpu_custom_call.1
$region0: #{tpu_custom_call.1}
  #allocation0 [shape = 'u32[]', space=smem, size = 0x4, offset = 0x4, fixed_abs, tag = 'smem constant byte address 0x4 - core index']
  #allocation1 [shape = 'u32[144,128]{1,0:T(1,128)}', space=vmem, size = 0x12000, scoped, tag = 'internal scratch']
  %s0 = inlined_call_operand.hbm [shape: f32[2,4,384], index: 0, kind: input, shape index: {}]
  %s1 = inlined_call_operand.vmem [shape: f32[8,36], index: 1, kind: input, shape index: {}]
  %s2 = inlined_call_operand.vmem [shape: f32[8,1], index: 2, kind: input, shape index: {}]
  %s3 = inlined_call_operand.hbm [shape: f32[2,8,256], index: 3, kind: output, shape index: {}]
  %s4 = sld [smem:[#allocation0]]
  $region49: #{tpu_custom_call.1} parent=0
    _
  %s6 = ssub.s32 1, %s4
  %s7 = scalar_select 0, %s6, %s4
  $region1: #{tpu_custom_call.1} parent=0
    #allocation2 [shape = 'u8[12288]{0}', space=vmem, size = 0x3000, scoped, tag = 'input window, operand 0']
    #allocation3 [shape = 's32[2]{0}', space=sflag, size = 0x8, scoped, tag = 'scoped memory for tpu_custom_call.1']
    #allocation4 [shape = 's32[2]{0}', space=sflag, size = 0x8, scoped, tag = 'scoped memory for tpu_custom_call.1']
    #allocation5 [shape = 'u8[16384]{0}', space=vmem, size = 0x4000, scoped, tag = 'output window, operand 0']
    %8 = vsyncpa [#allocation3], 0
    %s9 = scalar_lea.sflag [#allocation3], 1
    %10 = vsyncpa %s9, 0
    %11 = vsyncpa [#allocation4], 0
    %s12 = scalar_lea.sflag [#allocation4], 1
    %13 = vsyncpa %s12, 0
    loop: start=0, step=1, limit=4
    $region2: #{tpu_custom_call.1} parent=1 // loop_pre_header
      _
    $region3: #{tpu_custom_call.1} parent=1 // loop_header
      %s15 = sphi 0, %s19
      %p16 = scmp.ge.s32.totalorder %s15, 4
      %s25 = sphi 0, %s27
      %s28 = sphi 0, %s25
      %s29 = sphi 0, %s28
      %s45 = sphi 0, %s29
      %s49 = sphi 0, %s49
      %s51 = sphi 0, %s49
      %s52 = sphi 0, %s51
      %s66 = sphi 0, %s52
      %s70 = sphi 0, %s70
      %s72 = sphi 0, %s70
      %s73 = sphi 0, %s72
      %s87 = sphi 0, %s73
      %s93 = sphi 0, %s95
      %s96 = sphi 0, %s93
      %s97 = sphi 0, %s96
      %s113 = sphi 0, %s97
    $region4: #{tpu_custom_call.1} parent=1 // loop_header_branch
      %18 = sbr.rel (%p16) target = $region8
    $region5: #{tpu_custom_call.1} parent=1 // loop_body
      %s20 = ssub.s32 %s15, 1
      %s21 = ssub.s32 %s15, 2
      %s22 = sadd.s32 %s15, 1
      %s23 = ssub.s32 %s15, %s22
      %p24 = scmp.eq.s32.totalorder %s23, 0
      %s26 = sadd.s32 %s25, 1
      %s27 = scalar_select %p24, %s25, %s26
      %p30 = pneg %p24
      %p31 = scmp.eq.s32.totalorder %s15, 1
      %p32 = por %p30, %p31
      %p33 = scmp.ne.s32.totalorder %s25, %s28
      %p34 = scmp.eq.s32.totalorder %s15, 0
      %p35 = por %p33, %p34
      %p36 = scmp.ne.s32.totalorder %s25, %s28
      %p37 = scmp.eq.s32.totalorder %s20, 1
      %p38 = por %p36, %p37
      %p39 = scmp.ne.s32.totalorder %s28, %s29
      %p40 = scmp.eq.s32.totalorder %s20, 0
      %p41 = por %p39, %p40
      %p42 = scmp.ne.s32.totalorder %s28, %s29
      %p43 = scmp.eq.s32.totalorder %s21, 1
      %p44 = por %p42, %p43
      %p46 = scmp.ne.s32.totalorder %s29, %s45
      %p47 = scmp.eq.s32.totalorder %s21, 0
      %p48 = por %p46, %p47
      %s50 = sadd.s32 %s49, 1
      %p53 = scmp.eq.s32.totalorder %s15, 1
      %p54 = scmp.ne.s32.totalorder %s49, %s51
      %p55 = scmp.eq.s32.totalorder %s15, 0
      %p56 = por %p54, %p55
      %p57 = scmp.ne.s32.totalorder %s49, %s51
      %p58 = scmp.eq.s32.totalorder %s20, 1
      %p59 = por %p57, %p58
      %p60 = scmp.ne.s32.totalorder %s51, %s52
      %p61 = scmp.eq.s32.totalorder %s20, 0
      %p62 = por %p60, %p61
      %p63 = scmp.ne.s32.totalorder %s51, %s52
      %p64 = scmp.eq.s32.totalorder %s21, 1
      %p65 = por %p63, %p64
      %p67 = scmp.ne.s32.totalorder %s52, %s66
      %p68 = scmp.eq.s32.totalorder %s21, 0
      %p69 = por %p67, %p68
      %s71 = sadd.s32 %s70, 1
      %p74 = scmp.eq.s32.totalorder %s15, 1
      %p75 = scmp.ne.s32.totalorder %s70, %s72
      %p76 = scmp.eq.s32.totalorder %s15, 0
      %p77 = por %p75, %p76
      %p78 = scmp.ne.s32.totalorder %s70, %s72
      %p79 = scmp.eq.s32.totalorder %s20, 1
      %p80 = por %p78, %p79
      %p81 = scmp.ne.s32.totalorder %s72, %s73
      %p82 = scmp.eq.s32.totalorder %s20, 0
      %p83 = por %p81, %p82
      %p84 = scmp.ne.s32.totalorder %s72, %s73
      %p85 = scmp.eq.s32.totalorder %s21, 1
      %p86 = por %p84, %p85
      %p88 = scmp.ne.s32.totalorder %s73, %s87
      %p89 = scmp.eq.s32.totalorder %s21, 0
      %p90 = por %p88, %p89
      %s91 = ssub.s32 %s15, %s22
      %p92 = scmp.eq.s32.totalorder %s91, 0
      %s94 = sadd.s32 %s93, 1
      %s95 = scalar_select %p92, %s93, %s94
      %p98 = pneg %p92
      %p99 = scmp.eq.s32.totalorder %s15, 1
      %p100 = por %p98, %p99
      %p101 = scmp.ne.s32.totalorder %s93, %s96
      %p102 = scmp.eq.s32.totalorder %s15, 0
      %p103 = por %p101, %p102
      %p104 = scmp.ne.s32.totalorder %s93, %s96
      %p105 = scmp.eq.s32.totalorder %s20, 1
      %p106 = por %p104, %p105
      %p107 = scmp.ne.s32.totalorder %s96, %s97
      %p108 = scmp.eq.s32.totalorder %s20, 0
      %p109 = por %p107, %p108
      %p110 = scmp.ne.s32.totalorder %s96, %s97
      %p111 = scmp.eq.s32.totalorder %s21, 1
      %p112 = por %p110, %p111
      %p114 = scmp.ne.s32.totalorder %s97, %s113
      %p115 = scmp.eq.s32.totalorder %s21, 0
      %p116 = por %p114, %p115
      %p117 = scmp.le.s32.totalorder 1, %s15
      %p118 = scmp.lt.s32.totalorder %s15, 3
      %p119 = pnand %p117, %p118
      %p120 = pneg %p119
      // Predicated region
      $region9: #{tpu_custom_call.1} parent=5 // pred_check
        _
      $region10: #{tpu_custom_call.1} parent=5 // pred_check_branch
        %122 = sbr.rel (%p119) target = $region12
      $region11: #{tpu_custom_call.1} parent=5 // pred_region
        %s123 = ssub.s32 %s15, 1
        // Predicated region
        $region13: #{tpu_custom_call.1} parent=11 // pred_check
          %p124 = pneg %p62
        $region14: #{tpu_custom_call.1} parent=11 // pred_check_branch
          %126 = sbr.rel (%p124) target = $region16
        $region15: #{tpu_custom_call.1} parent=11 // pred_region
          _
        $region16: #{tpu_custom_call.1} parent=11 // pred_fallthru
          _
        // Predicated region
        $region17: #{tpu_custom_call.1} parent=11 // pred_check
          %p127 = pneg %p83
        $region18: #{tpu_custom_call.1} parent=11 // pred_check_branch
          %129 = sbr.rel (%p127) target = $region20
        $region19: #{tpu_custom_call.1} parent=11 // pred_region
          _
        $region20: #{tpu_custom_call.1} parent=11 // pred_fallthru
          _
      $region12: #{tpu_custom_call.1} parent=5 // pred_fallthru
        _
      %p130 = scmp.lt.s32.totalorder %s15, 2
      // Predicated region
      $region21: #{tpu_custom_call.1} parent=5 // pred_check
        %p131 = pneg %p130
      $region22: #{tpu_custom_call.1} parent=5 // pred_check_branch
        %133 = sbr.rel (%p131) target = $region24
      $region23: #{tpu_custom_call.1} parent=5 // pred_region
        // Predicated region
        $region25: #{tpu_custom_call.1} parent=23 // pred_check
          %p134 = pneg %p35
        $region26: #{tpu_custom_call.1} parent=23 // pred_check_branch
          %136 = sbr.rel (%p134) target = $region28
        $region27: #{tpu_custom_call.1} parent=23 // pred_region
          %s137 = sand.u32 %s25, 1
          %s138 = scalar_lea.sflag [#allocation3], %s137
          %s139 = sand.u32 %s25, 1
          %s140 = smul.addr %s139, 12
          %s141 = scalar_lea.vmem [#allocation2], %s140
          %s143 = ssub.s32 192, 192
          %144 = vsyncadd %s138, %s143
          %s145 = smul.addr %s15, 3
          %s146 = smul.addr %s145, 64
          %s147 = scalar_lea.hbm %s0, %s146
          %s149 = sshll.u32 %s141, 4
          %s150 = int_to_ptr.vmem [resolvable:$true] %s149
          %152 = dma.hbm_to_vmem [thread:$0]  %s147, 192, %s150, %s138
        $region28: #{tpu_custom_call.1} parent=23 // pred_fallthru
          _
      $region24: #{tpu_custom_call.1} parent=5 // pred_fallthru
        _
      %p153 = scmp.le.s32.totalorder 1, %s15
      %p154 = scmp.lt.s32.totalorder %s15, 3
      %p155 = pnand %p153, %p154
      %p156 = pneg %p155
      // Predicated region
      $region29: #{tpu_custom_call.1} parent=5 // pred_check
        _
      $region30: #{tpu_custom_call.1} parent=5 // pred_check_branch
        %158 = sbr.rel (%p155) target = $region32
      $region31: #{tpu_custom_call.1} parent=5 // pred_region
        %s159 = ssub.s32 %s15, 1
        %s160 = sand.u32 %s28, 1
        %s161 = scalar_lea.sflag [#allocation3], %s160
        %s162 = sand.u32 %s28, 1
        %s163 = smul.addr %s162, 12
        %s164 = scalar_lea.vmem [#allocation2], %s163
        // Predicated region
        $region33: #{tpu_custom_call.1} parent=31 // pred_check
          %p165 = pneg %p41
        $region34: #{tpu_custom_call.1} parent=31 // pred_check_branch
          %167 = sbr.rel (%p165) target = $region36
        $region35: #{tpu_custom_call.1} parent=31 // pred_region
          %168 = dma.done %s161, 192
        $region36: #{tpu_custom_call.1} parent=31 // pred_fallthru
          _
        %s169 = sand.u32 %s28, 1
        %s170 = scalar_lea.sflag [#allocation3], %s169
        %s171 = sand.u32 %s28, 1
        %s172 = smul.addr %s171, 12
        %s173 = scalar_lea.vmem [#allocation2], %s172
        %p174 = pneg %p41
        %p175 = pneg %p38
        %p176 = pneg %p62
        %p177 = pneg %p59
        %p178 = pneg %p83
        %p179 = pneg %p80
        %p180 = pneg %p109
        %p181 = pneg %p106
        %s182 = sand.u32 %s96, 1
        %s183 = scalar_lea.sflag [#allocation4], %s182
        %s184 = sand.u32 %s96, 1
        %s185 = smul.addr %s184, 16
        %s186 = scalar_lea.vmem [#allocation5], %s185
        %v187 = vld [vmem:[%s1] sm:$0xff]
        %v188 = vld [vmem:[%s164] sm:$0xff]
        %v189 = vld [vmem:[%s164 + $0x8] sm:$0xf]
        %v190 = vld [vmem:[%s2] sm:$0xff]
        %192 = vset.pattern.permute.xlu0 0
        %193 = vperm.xlu0 %192, %v190
        %v194 = vpop.permute.xlu0 %193
        %197 = vset.pattern.permute.xlu0 0
        %198 = vperm.xlu0 %197, %v187
        %v199 = vpop.permute.xlu0 %198
        %v202 = vlaneseq
        %v203 = vshrl.u32 %v202, 7
        %v204 = vsub.s32 0, %v203
        %v205 = vrot.slane %v188, %v204
        %v206 = vlaneseq
        %v207 = vshrl.u32 %v206, 7
        %v208 = vsub.s32 4, %v207
        %v209 = vrot.slane %v188, %v208
        %v212 = vlaneseq
        %v213 = vshrl.u32 %v212, 7
        %v214 = vsub.s32 0, %v213
        %v215 = vrot.slane %v205, %v214
        %v216 = vlaneseq
        %v217 = vshrl.u32 %v216, 7
        %v218 = vsub.s32 0, %v217
        %v219 = vrot.slane %v209, %v218
        %v220 = vmul.f32 %v199, %v215
        %v221 = vmul.f32 %v199, %v219
        %v222 = vadd.f32 %v194, %v220
        %v223 = vadd.f32 %v194, %v221
        %224 = vset.pattern.permute.xlu0 9
        %225 = vperm.xlu0 %224, %v187
        %v226 = vpop.permute.xlu0 %225
        %v228 = vlaneseq
        %v229 = vshrl.u32 %v228, 7
        %v230 = vsub.s32 1, %v229
        %v231 = vrot.slane %v188, %v230
        %v232 = vlaneseq
        %v233 = vshrl.u32 %v232, 7
        %v234 = vsub.s32 5, %v233
        %v235 = vrot.slane %v188, %v234
        %v238 = vlaneseq
        %v239 = vshrl.u32 %v238, 7
        %v240 = vsub.s32 1, %v239
        %v241 = vrot.slane %v231, %v240
        %v242 = vlaneseq
        %v243 = vshrl.u32 %v242, 7
        %v244 = vsub.s32 1, %v243
        %v245 = vrot.slane %v235, %v244
        %v246 = vmul.f32 %v226, %v241
        %v247 = vmul.f32 %v226, %v245
        %v248 = vadd.f32 %v222, %v246
        %v249 = vadd.f32 %v223, %v247
        %250 = vset.pattern.permute.xlu0 18
        %251 = vperm.xlu0 %250, %v187
        %v252 = vpop.permute.xlu0 %251
        %v254 = vlaneseq
        %v255 = vshrl.u32 %v254, 7
        %v256 = vsub.s32 2, %v255
        %v257 = vrot.slane %v188, %v256
        %v258 = vlaneseq
        %v259 = vshrl.u32 %v258, 7
        %v260 = vsub.s32 6, %v259
        %v261 = vrot.slane %v188, %v260
        %v264 = vlaneseq
        %v265 = vshrl.u32 %v264, 7
        %v266 = vsub.s32 2, %v265
        %v267 = vrot.slane %v257, %v266
        %v268 = vlaneseq
        %v269 = vshrl.u32 %v268, 7
        %v270 = vsub.s32 2, %v269
        %v271 = vrot.slane %v261, %v270
        %v272 = vmul.f32 %v252, %v267
        %v273 = vmul.f32 %v252, %v271
        %v274 = vadd.f32 %v248, %v272
        %v275 = vadd.f32 %v249, %v273
        %276 = vset.pattern.permute.xlu0 27
        %277 = vperm.xlu0 %276, %v187
        %v278 = vpop.permute.xlu0 %277
        %v280 = vlaneseq
        %v281 = vshrl.u32 %v280, 7
        %v282 = vsub.s32 3, %v281
        %v283 = vrot.slane %v188, %v282
        %v284 = vlaneseq
        %v285 = vshrl.u32 %v284, 7
        %v286 = vsub.s32 7, %v285
        %v287 = vrot.slane %v188, %v286
        %v290 = vlaneseq
        %v291 = vshrl.u32 %v290, 7
        %v292 = vsub.s32 3, %v291
        %v293 = vrot.slane %v283, %v292
        %v294 = vlaneseq
        %v295 = vshrl.u32 %v294, 7
        %v296 = vsub.s32 3, %v295
        %v297 = vrot.slane %v287, %v296
        %v298 = vmul.f32 %v278, %v293
        %v299 = vmul.f32 %v278, %v297
        %v300 = vadd.f32 %v274, %v298
        %v301 = vadd.f32 %v275, %v299
        %302 = vset.pattern.permute.xlu0 1
        %303 = vperm.xlu0 %302, %v187
        %v304 = vpop.permute.xlu0 %303
        %v307 = vlaneseq
        %v308 = vshrl.u32 %v307, 7
        %v309 = vsub.s32 0, %v308
        %v310 = vrot.slane %v189, %v309
        %v312 = vlaneseq
        %v313 = vshrl.u32 %v312, 7
        %v314 = vsub.s32 0, %v313
        %v315 = vrot.slane %v310, %v314
        %v316 = vmul.f32 %v304, %v215
        %v317 = vmul.f32 %v304, %v219
        %v318 = vmul.f32 %v304, %v315
        %322 = vrot.lane.b32.xlu0 %v316, 127
        %v323 = vpop.permute.xlu0 %322
        %324 = vrot.lane.b32.xlu0 %v317, 127
        %v325 = vpop.permute.xlu0 %324
        %326 = vrot.lane.b32.xlu0 %v318, 127
        %v327 = vpop.permute.xlu0 %326
        %vm328 = vcmask 1039360
        %v329 = vsel %vm328, %v323, %v325
        %v330 = vsel %vm328, %v325, %v327
        %v333 = vadd.f32 %v300, %v329
        %v334 = vadd.f32 %v301, %v330
        %335 = vset.pattern.permute.xlu0 10
        %336 = vperm.xlu0 %335, %v187
        %v337 = vpop.permute.xlu0 %336
        %v339 = vlaneseq
        %v340 = vshrl.u32 %v339, 7
        %v341 = vsub.s32 1, %v340
        %v342 = vrot.slane %v189, %v341
        %v344 = vlaneseq
        %v345 = vshrl.u32 %v344, 7
        %v346 = vsub.s32 1, %v345
        %v347 = vrot.slane %v342, %v346
        %v348 = vmul.f32 %v337, %v241
        %v349 = vmul.f32 %v337, %v245
        %v350 = vmul.f32 %v337, %v347
        %354 = vrot.lane.b32.xlu0 %v348, 127
        %v355 = vpop.permute.xlu0 %354
        %356 = vrot.lane.b32.xlu0 %v349, 127
        %v357 = vpop.permute.xlu0 %356
        %358 = vrot.lane.b32.xlu0 %v350, 127
        %v359 = vpop.permute.xlu0 %358
        %v360 = vsel %vm328, %v355, %v357
        %v361 = vsel %vm328, %v357, %v359
        %v364 = vadd.f32 %v333, %v360
        %v365 = vadd.f32 %v334, %v361
        %366 = vset.pattern.permute.xlu0 19
        %367 = vperm.xlu0 %366, %v187
        %v368 = vpop.permute.xlu0 %367
        %v370 = vlaneseq
        %v371 = vshrl.u32 %v370, 7
        %v372 = vsub.s32 2, %v371
        %v373 = vrot.slane %v189, %v372
        %v375 = vlaneseq
        %v376 = vshrl.u32 %v375, 7
        %v377 = vsub.s32 2, %v376
        %v378 = vrot.slane %v373, %v377
        %v379 = vmul.f32 %v368, %v267
        %v380 = vmul.f32 %v368, %v271
        %v381 = vmul.f32 %v368, %v378
        %385 = vrot.lane.b32.xlu0 %v379, 127
        %v386 = vpop.permute.xlu0 %385
        %387 = vrot.lane.b32.xlu0 %v380, 127
        %v388 = vpop.permute.xlu0 %387
        %389 = vrot.lane.b32.xlu0 %v381, 127
        %v390 = vpop.permute.xlu0 %389
        %v391 = vsel %vm328, %v386, %v388
        %v392 = vsel %vm328, %v388, %v390
        %v395 = vadd.f32 %v364, %v391
        %v396 = vadd.f32 %v365, %v392
        %397 = vset.pattern.permute.xlu0 28
        %398 = vperm.xlu0 %397, %v187
        %v399 = vpop.permute.xlu0 %398
        %v401 = vlaneseq
        %v402 = vshrl.u32 %v401, 7
        %v403 = vsub.s32 3, %v402
        %v404 = vrot.slane %v189, %v403
        %v406 = vlaneseq
        %v407 = vshrl.u32 %v406, 7
        %v408 = vsub.s32 3, %v407
        %v409 = vrot.slane %v404, %v408
        %v410 = vmul.f32 %v399, %v293
        %v411 = vmul.f32 %v399, %v297
        %v412 = vmul.f32 %v399, %v409
        %416 = vrot.lane.b32.xlu0 %v410, 127
        %v417 = vpop.permute.xlu0 %416
        %418 = vrot.lane.b32.xlu0 %v411, 127
        %v419 = vpop.permute.xlu0 %418
        %420 = vrot.lane.b32.xlu0 %v412, 127
        %v421 = vpop.permute.xlu0 %420
        %v422 = vsel %vm328, %v417, %v419
        %v423 = vsel %vm328, %v419, %v421
        %v426 = vadd.f32 %v395, %v422
        %v427 = vadd.f32 %v396, %v423
        %428 = vset.pattern.permute.xlu0 2
        %429 = vperm.xlu0 %428, %v187
        %v430 = vpop.permute.xlu0 %429
        %v432 = vmul.f32 %v430, %v215
        %v433 = vmul.f32 %v430, %v219
        %v434 = vmul.f32 %v430, %v315
        %438 = vrot.lane.b32.xlu0 %v432, 126
        %v439 = vpop.permute.xlu0 %438
        %440 = vrot.lane.b32.xlu0 %v433, 126
        %v441 = vpop.permute.xlu0 %440
        %442 = vrot.lane.b32.xlu0 %v434, 126
        %v443 = vpop.permute.xlu0 %442
        %vm444 = vcmask 1031168
        %v445 = vsel %vm444, %v439, %v441
        %v446 = vsel %vm444, %v441, %v443
        %v449 = vadd.f32 %v426, %v445
        %v450 = vadd.f32 %v427, %v446
        %451 = vset.pattern.permute.xlu0 11
        %452 = vperm.xlu0 %451, %v187
        %v453 = vpop.permute.xlu0 %452
        %v455 = vmul.f32 %v453, %v241
        %v456 = vmul.f32 %v453, %v245
        %v457 = vmul.f32 %v453, %v347
        %461 = vrot.lane.b32.xlu0 %v455, 126
        %v462 = vpop.permute.xlu0 %461
        %463 = vrot.lane.b32.xlu0 %v456, 126
        %v464 = vpop.permute.xlu0 %463
        %465 = vrot.lane.b32.xlu0 %v457, 126
        %v466 = vpop.permute.xlu0 %465
        %v467 = vsel %vm444, %v462, %v464
        %v468 = vsel %vm444, %v464, %v466
        %v471 = vadd.f32 %v449, %v467
        %v472 = vadd.f32 %v450, %v468
        %473 = vset.pattern.permute.xlu0 20
        %474 = vperm.xlu0 %473, %v187
        %v475 = vpop.permute.xlu0 %474
        %v477 = vmul.f32 %v475, %v267
        %v478 = vmul.f32 %v475, %v271
        %v479 = vmul.f32 %v475, %v378
        %483 = vrot.lane.b32.xlu0 %v477, 126
        %v484 = vpop.permute.xlu0 %483
        %485 = vrot.lane.b32.xlu0 %v478, 126
        %v486 = vpop.permute.xlu0 %485
        %487 = vrot.lane.b32.xlu0 %v479, 126
        %v488 = vpop.permute.xlu0 %487
        %v489 = vsel %vm444, %v484, %v486
        %v490 = vsel %vm444, %v486, %v488
        %v493 = vadd.f32 %v471, %v489
        %v494 = vadd.f32 %v472, %v490
        %495 = vset.pattern.permute.xlu0 29
        %496 = vperm.xlu0 %495, %v187
        %v497 = vpop.permute.xlu0 %496
        %v499 = vmul.f32 %v497, %v293
        %v500 = vmul.f32 %v497, %v297
        %v501 = vmul.f32 %v497, %v409
        %505 = vrot.lane.b32.xlu0 %v499, 126
        %v506 = vpop.permute.xlu0 %505
        %507 = vrot.lane.b32.xlu0 %v500, 126
        %v508 = vpop.permute.xlu0 %507
        %509 = vrot.lane.b32.xlu0 %v501, 126
        %v510 = vpop.permute.xlu0 %509
        %v511 = vsel %vm444, %v506, %v508
        %v512 = vsel %vm444, %v508, %v510
        %v515 = vadd.f32 %v493, %v511
        %v516 = vadd.f32 %v494, %v512
        %517 = vset.pattern.permute.xlu0 3
        %518 = vperm.xlu0 %517, %v187
        %v519 = vpop.permute.xlu0 %518
        %v521 = vmul.f32 %v519, %v215
        %v522 = vmul.f32 %v519, %v219
        %v523 = vmul.f32 %v519, %v315
        %527 = vrot.lane.b32.xlu0 %v521, 112
        %v528 = vpop.permute.xlu0 %527
        %529 = vrot.lane.b32.xlu0 %v522, 112
        %v530 = vpop.permute.xlu0 %529
        %531 = vrot.lane.b32.xlu0 %v523, 112
        %v532 = vpop.permute.xlu0 %531
        %vm533 = vcmask 916480
        %v534 = vsel %vm533, %v528, %v530
        %v535 = vsel %vm533, %v530, %v532
        %v538 = vadd.f32 %v515, %v534
        %v539 = vadd.f32 %v516, %v535
        %540 = vset.pattern.permute.xlu0 12
        %541 = vperm.xlu0 %540, %v187
        %v542 = vpop.permute.xlu0 %541
        %v544 = vmul.f32 %v542, %v241
        %v545 = vmul.f32 %v542, %v245
        %v546 = vmul.f32 %v542, %v347
        %550 = vrot.lane.b32.xlu0 %v544, 112
        %v551 = vpop.permute.xlu0 %550
        %552 = vrot.lane.b32.xlu0 %v545, 112
        %v553 = vpop.permute.xlu0 %552
        %554 = vrot.lane.b32.xlu0 %v546, 112
        %v555 = vpop.permute.xlu0 %554
        %v556 = vsel %vm533, %v551, %v553
        %v557 = vsel %vm533, %v553, %v555
        %v560 = vadd.f32 %v538, %v556
        %v561 = vadd.f32 %v539, %v557
        %562 = vset.pattern.permute.xlu0 21
        %563 = vperm.xlu0 %562, %v187
        %v564 = vpop.permute.xlu0 %563
        %v566 = vmul.f32 %v564, %v267
        %v567 = vmul.f32 %v564, %v271
        %v568 = vmul.f32 %v564, %v378
        %572 = vrot.lane.b32.xlu0 %v566, 112
        %v573 = vpop.permute.xlu0 %572
        %574 = vrot.lane.b32.xlu0 %v567, 112
        %v575 = vpop.permute.xlu0 %574
        %576 = vrot.lane.b32.xlu0 %v568, 112
        %v577 = vpop.permute.xlu0 %576
        %v578 = vsel %vm533, %v573, %v575
        %v579 = vsel %vm533, %v575, %v577
        %v582 = vadd.f32 %v560, %v578
        %v583 = vadd.f32 %v561, %v579
        %584 = vset.pattern.permute.xlu0 30
        %585 = vperm.xlu0 %584, %v187
        %v586 = vpop.permute.xlu0 %585
        %v588 = vmul.f32 %v586, %v293
        %v589 = vmul.f32 %v586, %v297
        %v590 = vmul.f32 %v586, %v409
        %594 = vrot.lane.b32.xlu0 %v588, 112
        %v595 = vpop.permute.xlu0 %594
        %596 = vrot.lane.b32.xlu0 %v589, 112
        %v597 = vpop.permute.xlu0 %596
        %598 = vrot.lane.b32.xlu0 %v590, 112
        %v599 = vpop.permute.xlu0 %598
        %v600 = vsel %vm533, %v595, %v597
        %v601 = vsel %vm533, %v597, %v599
        %v604 = vadd.f32 %v582, %v600
        %v605 = vadd.f32 %v583, %v601
        %606 = vset.pattern.permute.xlu0 4
        %607 = vperm.xlu0 %606, %v187
        %v608 = vpop.permute.xlu0 %607
        %v610 = vmul.f32 %v608, %v215
        %v611 = vmul.f32 %v608, %v219
        %v612 = vmul.f32 %v608, %v315
        %616 = vrot.lane.b32.xlu0 %v610, 111
        %v617 = vpop.permute.xlu0 %616
        %618 = vrot.lane.b32.xlu0 %v611, 111
        %v619 = vpop.permute.xlu0 %618
        %620 = vrot.lane.b32.xlu0 %v612, 111
        %v621 = vpop.permute.xlu0 %620
        %vm622 = vcmask 908288
        %v623 = vsel %vm622, %v617, %v619
        %v624 = vsel %vm622, %v619, %v621
        %v627 = vadd.f32 %v604, %v623
        %v628 = vadd.f32 %v605, %v624
        %629 = vset.pattern.permute.xlu0 13
        %630 = vperm.xlu0 %629, %v187
        %v631 = vpop.permute.xlu0 %630
        %v633 = vmul.f32 %v631, %v241
        %v634 = vmul.f32 %v631, %v245
        %v635 = vmul.f32 %v631, %v347
        %639 = vrot.lane.b32.xlu0 %v633, 111
        %v640 = vpop.permute.xlu0 %639
        %641 = vrot.lane.b32.xlu0 %v634, 111
        %v642 = vpop.permute.xlu0 %641
        %643 = vrot.lane.b32.xlu0 %v635, 111
        %v644 = vpop.permute.xlu0 %643
        %v645 = vsel %vm622, %v640, %v642
        %v646 = vsel %vm622, %v642, %v644
        %v649 = vadd.f32 %v627, %v645
        %v650 = vadd.f32 %v628, %v646
        %651 = vset.pattern.permute.xlu0 22
        %652 = vperm.xlu0 %651, %v187
        %v653 = vpop.permute.xlu0 %652
        %v655 = vmul.f32 %v653, %v267
        %v656 = vmul.f32 %v653, %v271
        %v657 = vmul.f32 %v653, %v378
        %661 = vrot.lane.b32.xlu0 %v655, 111
        %v662 = vpop.permute.xlu0 %661
        %663 = vrot.lane.b32.xlu0 %v656, 111
        %v664 = vpop.permute.xlu0 %663
        %665 = vrot.lane.b32.xlu0 %v657, 111
        %v666 = vpop.permute.xlu0 %665
        %v667 = vsel %vm622, %v662, %v664
        %v668 = vsel %vm622, %v664, %v666
        %v671 = vadd.f32 %v649, %v667
        %v672 = vadd.f32 %v650, %v668
        %673 = vset.pattern.permute.xlu0 31
        %674 = vperm.xlu0 %673, %v187
        %v675 = vpop.permute.xlu0 %674
        %v677 = vmul.f32 %v675, %v293
        %v678 = vmul.f32 %v675, %v297
        %v679 = vmul.f32 %v675, %v409
        %683 = vrot.lane.b32.xlu0 %v677, 111
        %v684 = vpop.permute.xlu0 %683
        %685 = vrot.lane.b32.xlu0 %v678, 111
        %v686 = vpop.permute.xlu0 %685
        %687 = vrot.lane.b32.xlu0 %v679, 111
        %v688 = vpop.permute.xlu0 %687
        %v689 = vsel %vm622, %v684, %v686
        %v690 = vsel %vm622, %v686, %v688
        %v693 = vadd.f32 %v671, %v689
        %v694 = vadd.f32 %v672, %v690
        %695 = vset.pattern.permute.xlu0 5
        %696 = vperm.xlu0 %695, %v187
        %v697 = vpop.permute.xlu0 %696
        %v699 = vmul.f32 %v697, %v215
        %v700 = vmul.f32 %v697, %v219
        %v701 = vmul.f32 %v697, %v315
        %705 = vrot.lane.b32.xlu0 %v699, 110
        %v706 = vpop.permute.xlu0 %705
        %707 = vrot.lane.b32.xlu0 %v700, 110
        %v708 = vpop.permute.xlu0 %707
        %709 = vrot.lane.b32.xlu0 %v701, 110
        %v710 = vpop.permute.xlu0 %709
        %vm711 = vcmask 900096
        %v712 = vsel %vm711, %v706, %v708
        %v713 = vsel %vm711, %v708, %v710
        %v716 = vadd.f32 %v693, %v712
        %v717 = vadd.f32 %v694, %v713
        %718 = vset.pattern.permute.xlu0 14
        %719 = vperm.xlu0 %718, %v187
        %v720 = vpop.permute.xlu0 %719
        %v722 = vmul.f32 %v720, %v241
        %v723 = vmul.f32 %v720, %v245
        %v724 = vmul.f32 %v720, %v347
        %728 = vrot.lane.b32.xlu0 %v722, 110
        %v729 = vpop.permute.xlu0 %728
        %730 = vrot.lane.b32.xlu0 %v723, 110
        %v731 = vpop.permute.xlu0 %730
        %732 = vrot.lane.b32.xlu0 %v724, 110
        %v733 = vpop.permute.xlu0 %732
        %v734 = vsel %vm711, %v729, %v731
        %v735 = vsel %vm711, %v731, %v733
        %v738 = vadd.f32 %v716, %v734
        %v739 = vadd.f32 %v717, %v735
        %740 = vset.pattern.permute.xlu0 23
        %741 = vperm.xlu0 %740, %v187
        %v742 = vpop.permute.xlu0 %741
        %v744 = vmul.f32 %v742, %v267
        %v745 = vmul.f32 %v742, %v271
        %v746 = vmul.f32 %v742, %v378
        %750 = vrot.lane.b32.xlu0 %v744, 110
        %v751 = vpop.permute.xlu0 %750
        %752 = vrot.lane.b32.xlu0 %v745, 110
        %v753 = vpop.permute.xlu0 %752
        %754 = vrot.lane.b32.xlu0 %v746, 110
        %v755 = vpop.permute.xlu0 %754
        %v756 = vsel %vm711, %v751, %v753
        %v757 = vsel %vm711, %v753, %v755
        %v760 = vadd.f32 %v738, %v756
        %v761 = vadd.f32 %v739, %v757
        %762 = vset.pattern.permute.xlu0 32
        %763 = vperm.xlu0 %762, %v187
        %v764 = vpop.permute.xlu0 %763
        %v766 = vmul.f32 %v764, %v293
        %v767 = vmul.f32 %v764, %v297
        %v768 = vmul.f32 %v764, %v409
        %772 = vrot.lane.b32.xlu0 %v766, 110
        %v773 = vpop.permute.xlu0 %772
        %774 = vrot.lane.b32.xlu0 %v767, 110
        %v775 = vpop.permute.xlu0 %774
        %776 = vrot.lane.b32.xlu0 %v768, 110
        %v777 = vpop.permute.xlu0 %776
        %v778 = vsel %vm711, %v773, %v775
        %v779 = vsel %vm711, %v775, %v777
        %v782 = vadd.f32 %v760, %v778
        %v783 = vadd.f32 %v761, %v779
        %784 = vset.pattern.permute.xlu0 6
        %785 = vperm.xlu0 %784, %v187
        %v786 = vpop.permute.xlu0 %785
        %v788 = vmul.f32 %v786, %v215
        %v789 = vmul.f32 %v786, %v219
        %v790 = vmul.f32 %v786, %v315
        %794 = vrot.lane.b32.xlu0 %v788, 96
        %v795 = vpop.permute.xlu0 %794
        %796 = vrot.lane.b32.xlu0 %v789, 96
        %v797 = vpop.permute.xlu0 %796
        %798 = vrot.lane.b32.xlu0 %v790, 96
        %v799 = vpop.permute.xlu0 %798
        %vm800 = vcmask 785408
        %v801 = vsel %vm800, %v795, %v797
        %v802 = vsel %vm800, %v797, %v799
        %v805 = vadd.f32 %v782, %v801
        %v806 = vadd.f32 %v783, %v802
        %807 = vset.pattern.permute.xlu0 15
        %808 = vperm.xlu0 %807, %v187
        %v809 = vpop.permute.xlu0 %808
        %v811 = vmul.f32 %v809, %v241
        %v812 = vmul.f32 %v809, %v245
        %v813 = vmul.f32 %v809, %v347
        %817 = vrot.lane.b32.xlu0 %v811, 96
        %v818 = vpop.permute.xlu0 %817
        %819 = vrot.lane.b32.xlu0 %v812, 96
        %v820 = vpop.permute.xlu0 %819
        %821 = vrot.lane.b32.xlu0 %v813, 96
        %v822 = vpop.permute.xlu0 %821
        %v823 = vsel %vm800, %v818, %v820
        %v824 = vsel %vm800, %v820, %v822
        %v827 = vadd.f32 %v805, %v823
        %v828 = vadd.f32 %v806, %v824
        %829 = vset.pattern.permute.xlu0 24
        %830 = vperm.xlu0 %829, %v187
        %v831 = vpop.permute.xlu0 %830
        %v833 = vmul.f32 %v831, %v267
        %v834 = vmul.f32 %v831, %v271
        %v835 = vmul.f32 %v831, %v378
        %839 = vrot.lane.b32.xlu0 %v833, 96
        %v840 = vpop.permute.xlu0 %839
        %841 = vrot.lane.b32.xlu0 %v834, 96
        %v842 = vpop.permute.xlu0 %841
        %843 = vrot.lane.b32.xlu0 %v835, 96
        %v844 = vpop.permute.xlu0 %843
        %v845 = vsel %vm800, %v840, %v842
        %v846 = vsel %vm800, %v842, %v844
        %v849 = vadd.f32 %v827, %v845
        %v850 = vadd.f32 %v828, %v846
        %851 = vset.pattern.permute.xlu0 33
        %852 = vperm.xlu0 %851, %v187
        %v853 = vpop.permute.xlu0 %852
        %v855 = vmul.f32 %v853, %v293
        %v856 = vmul.f32 %v853, %v297
        %v857 = vmul.f32 %v853, %v409
        %861 = vrot.lane.b32.xlu0 %v855, 96
        %v862 = vpop.permute.xlu0 %861
        %863 = vrot.lane.b32.xlu0 %v856, 96
        %v864 = vpop.permute.xlu0 %863
        %865 = vrot.lane.b32.xlu0 %v857, 96
        %v866 = vpop.permute.xlu0 %865
        %v867 = vsel %vm800, %v862, %v864
        %v868 = vsel %vm800, %v864, %v866
        %v871 = vadd.f32 %v849, %v867
        %v872 = vadd.f32 %v850, %v868
        %873 = vset.pattern.permute.xlu0 7
        %874 = vperm.xlu0 %873, %v187
        %v875 = vpop.permute.xlu0 %874
        %v877 = vmul.f32 %v875, %v215
        %v878 = vmul.f32 %v875, %v219
        %v879 = vmul.f32 %v875, %v315
        %883 = vrot.lane.b32.xlu0 %v877, 95
        %v884 = vpop.permute.xlu0 %883
        %885 = vrot.lane.b32.xlu0 %v878, 95
        %v886 = vpop.permute.xlu0 %885
        %887 = vrot.lane.b32.xlu0 %v879, 95
        %v888 = vpop.permute.xlu0 %887
        %vm889 = vcmask 777216
        %v890 = vsel %vm889, %v884, %v886
        %v891 = vsel %vm889, %v886, %v888
        %v894 = vadd.f32 %v871, %v890
        %v895 = vadd.f32 %v872, %v891
        %896 = vset.pattern.permute.xlu0 16
        %897 = vperm.xlu0 %896, %v187
        %v898 = vpop.permute.xlu0 %897
        %v900 = vmul.f32 %v898, %v241
        %v901 = vmul.f32 %v898, %v245
        %v902 = vmul.f32 %v898, %v347
        %906 = vrot.lane.b32.xlu0 %v900, 95
        %v907 = vpop.permute.xlu0 %906
        %908 = vrot.lane.b32.xlu0 %v901, 95
        %v909 = vpop.permute.xlu0 %908
        %910 = vrot.lane.b32.xlu0 %v902, 95
        %v911 = vpop.permute.xlu0 %910
        %v912 = vsel %vm889, %v907, %v909
        %v913 = vsel %vm889, %v909, %v911
        %v916 = vadd.f32 %v894, %v912
        %v917 = vadd.f32 %v895, %v913
        %918 = vset.pattern.permute.xlu0 25
        %919 = vperm.xlu0 %918, %v187
        %v920 = vpop.permute.xlu0 %919
        %v922 = vmul.f32 %v920, %v267
        %v923 = vmul.f32 %v920, %v271
        %v924 = vmul.f32 %v920, %v378
        %928 = vrot.lane.b32.xlu0 %v922, 95
        %v929 = vpop.permute.xlu0 %928
        %930 = vrot.lane.b32.xlu0 %v923, 95
        %v931 = vpop.permute.xlu0 %930
        %932 = vrot.lane.b32.xlu0 %v924, 95
        %v933 = vpop.permute.xlu0 %932
        %v934 = vsel %vm889, %v929, %v931
        %v935 = vsel %vm889, %v931, %v933
        %v938 = vadd.f32 %v916, %v934
        %v939 = vadd.f32 %v917, %v935
        %940 = vset.pattern.permute.xlu0 34
        %941 = vperm.xlu0 %940, %v187
        %v942 = vpop.permute.xlu0 %941
        %v944 = vmul.f32 %v942, %v293
        %v945 = vmul.f32 %v942, %v297
        %v946 = vmul.f32 %v942, %v409
        %950 = vrot.lane.b32.xlu0 %v944, 95
        %v951 = vpop.permute.xlu0 %950
        %952 = vrot.lane.b32.xlu0 %v945, 95
        %v953 = vpop.permute.xlu0 %952
        %954 = vrot.lane.b32.xlu0 %v946, 95
        %v955 = vpop.permute.xlu0 %954
        %v956 = vsel %vm889, %v951, %v953
        %v957 = vsel %vm889, %v953, %v955
        %v960 = vadd.f32 %v938, %v956
        %v961 = vadd.f32 %v939, %v957
        %962 = vset.pattern.permute.xlu0 8
        %963 = vperm.xlu0 %962, %v187
        %v964 = vpop.permute.xlu0 %963
        %v966 = vmul.f32 %v964, %v215
        %v967 = vmul.f32 %v964, %v219
        %v968 = vmul.f32 %v964, %v315
        %972 = vrot.lane.b32.xlu0 %v966, 94
        %v973 = vpop.permute.xlu0 %972
        %974 = vrot.lane.b32.xlu0 %v967, 94
        %v975 = vpop.permute.xlu0 %974
        %976 = vrot.lane.b32.xlu0 %v968, 94
        %v977 = vpop.permute.xlu0 %976
        %vm978 = vcmask 769024
        %v979 = vsel %vm978, %v973, %v975
        %v980 = vsel %vm978, %v975, %v977
        %v983 = vadd.f32 %v960, %v979
        %v984 = vadd.f32 %v961, %v980
        %985 = vset.pattern.permute.xlu0 17
        %986 = vperm.xlu0 %985, %v187
        %v987 = vpop.permute.xlu0 %986
        %v989 = vmul.f32 %v987, %v241
        %v990 = vmul.f32 %v987, %v245
        %v991 = vmul.f32 %v987, %v347
        %995 = vrot.lane.b32.xlu0 %v989, 94
        %v996 = vpop.permute.xlu0 %995
        %997 = vrot.lane.b32.xlu0 %v990, 94
        %v998 = vpop.permute.xlu0 %997
        %999 = vrot.lane.b32.xlu0 %v991, 94
        %v1000 = vpop.permute.xlu0 %999
        %v1001 = vsel %vm978, %v996, %v998
        %v1002 = vsel %vm978, %v998, %v1000
        %v1005 = vadd.f32 %v983, %v1001
        %v1006 = vadd.f32 %v984, %v1002
        %1007 = vset.pattern.permute.xlu0 26
        %1008 = vperm.xlu0 %1007, %v187
        %v1009 = vpop.permute.xlu0 %1008
        %v1011 = vmul.f32 %v1009, %v267
        %v1012 = vmul.f32 %v1009, %v271
        %v1013 = vmul.f32 %v1009, %v378
        %1017 = vrot.lane.b32.xlu0 %v1011, 94
        %v1018 = vpop.permute.xlu0 %1017
        %1019 = vrot.lane.b32.xlu0 %v1012, 94
        %v1020 = vpop.permute.xlu0 %1019
        %1021 = vrot.lane.b32.xlu0 %v1013, 94
        %v1022 = vpop.permute.xlu0 %1021
        %v1023 = vsel %vm978, %v1018, %v1020
        %v1024 = vsel %vm978, %v1020, %v1022
        %v1027 = vadd.f32 %v1005, %v1023
        %v1028 = vadd.f32 %v1006, %v1024
        %1029 = vset.pattern.permute.xlu0 35
        %1030 = vperm.xlu0 %1029, %v187
        %v1031 = vpop.permute.xlu0 %1030
        %v1033 = vmul.f32 %v1031, %v293
        %v1034 = vmul.f32 %v1031, %v297
        %v1035 = vmul.f32 %v1031, %v409
        %1039 = vrot.lane.b32.xlu0 %v1033, 94
        %v1040 = vpop.permute.xlu0 %1039
        %1041 = vrot.lane.b32.xlu0 %v1034, 94
        %v1042 = vpop.permute.xlu0 %1041
        %1043 = vrot.lane.b32.xlu0 %v1035, 94
        %v1044 = vpop.permute.xlu0 %1043
        %v1045 = vsel %vm978, %v1040, %v1042
        %v1046 = vsel %vm978, %v1042, %v1044
        %v1049 = vadd.f32 %v1027, %v1045
        %v1050 = vadd.f32 %v1028, %v1046
        %1051 = vst [vmem:[%s186] sm:$0xff] %v1049
        %1052 = vst [vmem:[%s186 + $0x8] sm:$0xff] %v1050
        %s1053 = sand.u32 %s96, 1
        %s1054 = scalar_lea.sflag [#allocation4], %s1053
        %s1055 = sand.u32 %s96, 1
        %s1056 = smul.addr %s1055, 16
        %s1057 = scalar_lea.vmem [#allocation5], %s1056
        // Predicated region
        $region37: #{tpu_custom_call.1} parent=31 // pred_check
          %p1058 = pneg %p106
        $region38: #{tpu_custom_call.1} parent=31 // pred_check_branch
          %1060 = sbr.rel (%p1058) target = $region40
        $region39: #{tpu_custom_call.1} parent=31 // pred_region
          %s1062 = ssub.s32 256, 256
          %1063 = vsyncadd %s1054, %s1062
          %s1064 = smul.addr %s20, 2
          %s1065 = smul.addr %s1064, 128
          %s1066 = scalar_lea.hbm %s3, %s1065
          %s1068 = sshll.u32 %s1057, 4
          %s1069 = int_to_ptr.vmem [resolvable:$true] %s1068
          %1071 = dma.vmem_to_hbm [thread:$0]  %s1069, 256, %s1066, %s1054
        $region40: #{tpu_custom_call.1} parent=31 // pred_fallthru
          _
      $region32: #{tpu_custom_call.1} parent=5 // pred_fallthru
        _
      %p1072 = scmp.le.s32.totalorder 2, %s15
      // Predicated region
      $region41: #{tpu_custom_call.1} parent=5 // pred_check
        %p1073 = pneg %p1072
      $region42: #{tpu_custom_call.1} parent=5 // pred_check_branch
        %1075 = sbr.rel (%p1073) target = $region44
      $region43: #{tpu_custom_call.1} parent=5 // pred_region
        %s1076 = ssub.s32 %s15, 2
        // Predicated region
        $region45: #{tpu_custom_call.1} parent=43 // pred_check
          %p1077 = pneg %p112
        $region46: #{tpu_custom_call.1} parent=43 // pred_check_branch
          %1079 = sbr.rel (%p1077) target = $region48
        $region47: #{tpu_custom_call.1} parent=43 // pred_region
          %s1080 = sand.u32 %s97, 1
          %s1081 = scalar_lea.sflag [#allocation4], %s1080
          %s1082 = sand.u32 %s97, 1
          %s1083 = smul.addr %s1082, 16
          %s1084 = scalar_lea.vmem [#allocation5], %s1083
          %1085 = dma.done %s1081, 256
        $region48: #{tpu_custom_call.1} parent=43 // pred_fallthru
          _
      $region44: #{tpu_custom_call.1} parent=5 // pred_fallthru
        _
    $region6: #{tpu_custom_call.1} parent=1 // loop_footer
      %s19 = sadd.s32 1, %s15
    $region7: #{tpu_custom_call.1} parent=1 // loop_footer_branch
      %14 = sbr.rel target = $region3
    $region8: #{tpu_custom_call.1} parent=1 // loop_exit
      _
    %1086 = vsyncpa [#allocation3], 1
    %s1087 = scalar_lea.sflag [#allocation3], 1
    %1088 = vsyncpa %s1087, 1
    %1089 = vsyncpa [#allocation4], 1
    %s1090 = scalar_lea.sflag [#allocation4], 1
    %1091 = vsyncpa %s1090, 1

</llo_original>
